<compile_context>
chip_gen: v6e
topology: v6e:2x2x1
jax: 0.10.0
libtpu: 0.0.40
codegen_flags: <defaults>
</compile_context>

<pallas_src>
import functools
import math

import jax
import jax.numpy as jnp
from jax import lax
from jax.experimental import pallas as pl
from jax.experimental.pallas import tpu as pltpu


_LANES = 128                 # lane-dense last dim (one vreg lane width)
_SUBLANES = 8
_MAX_ROWS_PER_BLOCK = 8192   # 8192 x 128 x 4 B = 4 MiB per f32 buffer per block


def _round_up(x, m):
    return ((x + m - 1) // m) * m


def _gumbel_gate_kernel(seed_ref, x_ref, o_ref, *, training, sample_eps):
    """Elementwise Gumbel-sigmoid straight-through gate on one (tile_rows, 128) tile."""
    x = x_ref[...].astype(jnp.float32)  # upcast in VMEM only (bf16 logits stay bf16 in HBM)

    if not training:
        o_ref[...] = (x >= 0.0).astype(o_ref.dtype)
        return

    tile_rows, lanes = x_ref.shape

    # ---- counter-based uniform RNG (portable: plain integer VPU ops, no pltpu.prng_*) ----
    # Global element index inside the padded (rows, 128) slab -> unique counter per element,
    # independent of tiling, so adjacent tiles automatically get decorrelated streams.
    row = lax.broadcasted_iota(jnp.int32, (tile_rows, lanes), 0)
    col = lax.broadcasted_iota(jnp.int32, (tile_rows, lanes), 1)
    idx = (pl.program_id(0) * tile_rows + row) * lanes + col
    z = idx.astype(jnp.uint32) + seed_ref[0].astype(jnp.uint32) * jnp.uint32(0x9E3779B9)
    # lowbias32-style avalanche (good bit balance on sequential counters).
    z = z ^ (z >> jnp.uint32(16))
    z = z * jnp.uint32(0x21F0AAAD)
    z = z ^ (z >> jnp.uint32(15))
    z = z * jnp.uint32(0x735A2D97)
    z = z ^ (z >> jnp.uint32(15))
    # Top 23 bits -> uniform [0, 1).
    u = (z >> jnp.uint32(9)).astype(jnp.float32) * jnp.float32(1.0 / (1 << 23))

    # soft >= 0.5  <=>  x + log(u+eps) - log(1-u+eps) >= 0  <=>  exp(x)*(u+eps) >= (1-u+eps)
    # (temperature > 0 only scales the pre-sigmoid value, so it never changes the hard sample).
    eps = jnp.float32(sample_eps)
    hard = jnp.exp(x) * (u + eps) >= (jnp.float32(1.0) - u + eps)
    o_ref[...] = hard.astype(o_ref.dtype)


def _gumbel_softmax_jax(logits, *, training, key, temperature, sample_eps, out_dtype):
    """Pure-JAX path (tiny gate tensors where kernel launch overhead dominates)."""
    x = logits.astype(jnp.float32)
    if not training:
        return (x >= 0.0).astype(out_dtype)
    if key is None:
        key = jax.random.PRNGKey(0)
    u = jax.random.uniform(key, x.shape, jnp.float32)
    g = jnp.log(u + sample_eps) - jnp.log(1.0 - u + sample_eps)
    soft = jax.nn.sigmoid((x + g) / temperature)
    return (soft >= 0.5).astype(out_dtype)


def _derive_seed(key, seed):
    """(1,) int32 seed for the kernel, without launching an extra jax.random kernel."""
    if seed is not None:
        return (jnp.asarray([seed], jnp.int32) & jnp.int32(0x7FFFFFFF))
    if key is None:
        key = jax.random.PRNGKey(0)
    karr = jnp.asarray(key)
    if jnp.issubdtype(karr.dtype, jax.dtypes.prng_key):
        kd = jax.random.key_data(key)
    else:
        kd = karr
    kd = kd.astype(jnp.uint32).reshape(-1)
    mixed = (kd[0] * jnp.uint32(0x9E3779B1)) ^ kd[-1]
    return (mixed & jnp.uint32(0x7FFFFFFF)).astype(jnp.int32).reshape(1)


def gumbel_softmax(logits, *, training=True, key=None, seed=None, temperature=1.0,
                   sample_eps=1e-8, out_dtype=jnp.float32,
                   allow_jax_fallback=True, min_pallas_elems=1 << 17):
    """Forward pass of dynconv's GumbelSoftmax gate (output dtype defaults to float32)."""
    assert temperature > 0.0, "hard straight-through forward assumes temperature > 0"
    orig_shape = logits.shape
    total = int(math.prod(orig_shape)) if orig_shape else 1

    if allow_jax_fallback and total < min_pallas_elems:
        # pallas_call launch + per-step overhead dominates for small gate tensors (N,C,1,1).
        return _gumbel_softmax_jax(logits, training=training, key=key,
                                   temperature=temperature, sample_eps=sample_eps,
                                   out_dtype=out_dtype)

    seed_arr = _derive_seed(key, seed) if training else jnp.zeros((1,), jnp.int32)

    # Lane-dense 2D layout: (rows, 128).  Only pad the flat array up to a multiple of 128
    # (< 128 extra elems); the grid's last block may be partial -- Pallas masks it.
    rows = pl.cdiv(total, _LANES)
    padded_total = rows * _LANES
    x_flat = jnp.ravel(logits)                       # layout-only when contiguous
    if padded_total != total:
        x_flat = jnp.pad(x_flat, (0, padded_total - total))
    x2 = x_flat.reshape(rows, _LANES)

    if rows <= 2 * _SUBLANES:
        tile_rows, grid_rows = rows, 1               # full-array block (valid even if rows % 8 != 0)
    else:
        # >= 2 blocks so both v7x TensorCores get work; cap block at 4 MiB (f32) per buffer.
        half = _round_up(pl.cdiv(rows, 2), _SUBLANES)
        tile_rows = min(_MAX_ROWS_PER_BLOCK, half)
        grid_rows = pl.cdiv(rows, tile_rows)

    # Explicit VMEM budget: double-buffered input + output blocks + headroom, capped for v7x.
    in_block_bytes = tile_rows * _LANES * jnp.dtype(x2.dtype).itemsize
    out_block_bytes = tile_rows * _LANES * jnp.dtype(out_dtype).itemsize
    vmem_limit = int(min(48 << 20, max(16 << 20, 2 * (in_block_bytes + out_block_bytes) + (4 << 20))))

    kernel = functools.partial(
        _gumbel_gate_kernel,
        training=bool(training),
        sample_eps=float(sample_eps),
    )

    out2 = pl.pallas_call(
        kernel,
        out_shape=jax.ShapeDtypeStruct((rows, _LANES), out_dtype),
        grid_spec=pltpu.PrefetchScalarGridSpec(
            num_scalar_prefetch=1,
            grid=(grid_rows,),
            in_specs=[pl.BlockSpec((tile_rows, _LANES), lambda i, seed_ref: (i, 0))],
            out_specs=pl.BlockSpec((tile_rows, _LANES), lambda i, seed_ref: (i, 0)),
        ),
        compiler_params=pltpu.CompilerParams(
            dimension_semantics=("parallel",),
            vmem_limit_bytes=vmem_limit,
        ),
    )(seed_arr, x2)

    out_flat = out2.reshape(-1)
    if padded_total != total:
        out_flat = out_flat[:total]
    return out_flat.reshape(orig_shape)


if __name__ == "__main__":
    key = jax.random.PRNGKey(0)
    k_logits, k_noise, k_stat = jax.random.split(key, 3)

    # Channel-saliency gate logits: (N, C, 1, 1).
    N, C = 2, 64
    logits = jax.random.normal(k_logits, (N, C, 1, 1), dtype=jnp.float32)

    # --- eval mode: exact check against (logits >= 0).float() ---
    out_eval = jax.block_until_ready(
        gumbel_softmax(logits, training=False, allow_jax_fallback=False))
    ref_eval = (logits >= 0).astype(jnp.float32)
    assert out_eval.shape == logits.shape and out_eval.dtype == jnp.float32
    assert jnp.array_equal(out_eval, ref_eval), "eval-mode mismatch vs reference"

    # --- training mode: hard straight-through samples (binary, same shape) ---
    out_train = jax.block_until_ready(
        gumbel_softmax(logits, training=True, key=k_noise, allow_jax_fallback=False))
    assert out_train.shape == logits.shape and out_train.dtype == jnp.float32
    assert bool(jnp.all((out_train == 0.0) | (out_train == 1.0))), "non-binary hard samples"

    # --- statistical sanity: zero logits => P(out == 1) ~ sigmoid(0) = 0.5 ---
    zeros = jnp.zeros((4, 64, 8, 8), jnp.float32)  # 16384 samples, exercises a 2-block grid
    out_stat = jax.block_until_ready(
        gumbel_softmax(zeros, training=True, key=k_stat, allow_jax_fallback=False))
    acc_rate = float(jnp.mean(out_stat))
    assert 0.45 < acc_rate < 0.55, f"training-mode acceptance rate off: {acc_rate}"

    print("KERNEL_OK")
</pallas_src>

<mosaic_0001>
module attributes {stable_mosaic.version = 11 : i64} {
  func.func @_gumbel_gate_kernel(%arg0: i32, %arg1: memref<1xi32, #tpu.memory_space<smem>>, %arg2: memref<1x128xf32, #tpu.memory_space<vmem>>, %arg3: memref<1x128xf32, #tpu.memory_space<vmem>>) attributes {dimension_semantics = [#tpu.dimension_semantics<parallel>], iteration_bounds = array<i64: 1>, scalar_prefetch = 1 : i64, scratch_operands = 0 : i64, tpu.core_type = #tpu.core_type<tc>, window_params = [{transform_indices = @transform_0, window_bounds = array<i64: 1, 128>}, {transform_indices = @transform_1, window_bounds = array<i64: 1, 128>}]} {
    %c0 = arith.constant 0 : index
    %c0_0 = arith.constant 0 : index
    %0 = vector.load %arg2[%c0, %c0_0] : memref<1x128xf32, #tpu.memory_space<vmem>>, vector<1x128xf32>
    %cst = arith.constant 0.000000e+00 : f32
    %1 = vector.broadcast %cst : f32 to vector<1x128xf32>
    %2 = arith.cmpf oge, %0, %1 : vector<1x128xf32>
    %3 = arith.extui %2 : vector<1x128xi1> to vector<1x128xi32>
    %4 = arith.sitofp %3 : vector<1x128xi32> to vector<1x128xf32>
    %c0_1 = arith.constant 0 : index
    %c0_2 = arith.constant 0 : index
    %5 = vector.load %arg3[%c0_1, %c0_2] : memref<1x128xf32, #tpu.memory_space<vmem>>, vector<1x128xf32>
    tpu.vector_store %arg3[%c0_1, %c0_2], %4 {strides = array<i32>} : memref<1x128xf32, #tpu.memory_space<vmem>>, vector<1x128xf32>,
    return
  }
  func.func @transform_0(%arg0: i32, %arg1: memref<1xi32, #tpu.memory_space<smem>>) -> (i32, i32) {
    %c0_i32 = arith.constant 0 : i32
    %c0_i32_0 = arith.constant 0 : i32
    return %arg0, %c0_i32 : i32, i32
  }
  func.func @transform_1(%arg0: i32, %arg1: memref<1xi32, #tpu.memory_space<smem>>) -> (i32, i32) {
    %c0_i32 = arith.constant 0 : i32
    %c0_i32_0 = arith.constant 0 : i32
    return %arg0, %c0_i32 : i32, i32
  }
}

</mosaic_0001>

<llo_original>
// kernel: tpu_custom_call.1
$region0: #{tpu_custom_call.1}
  #allocation0 [shape = 'u32[]', space=smem, size = 0x4, offset = 0x4, fixed_abs, tag = 'smem constant byte address 0x4 - core index']
  #allocation1 [shape = 'u32[144,128]{1,0:T(1,128)}', space=vmem, size = 0x12000, scoped, tag = 'internal scratch']
  #allocation2 [shape = 's32[1]{0}', space=sflag, size = 0x4, scoped, tag = 'scoped memory for tpu_custom_call.1']
  #allocation3 [shape = 's32[1]{0:T(128)S(6)}', space=smem, size = 0x200, scoped, tag = 'prefetched SMEM operand 0']
  %s0 = inlined_call_operand.<no memory space> [shape: s32[1], index: 0, kind: input, shape index: {}]
  %s1 = inlined_call_operand.vmem [shape: f32[1,128], index: 1, kind: input, shape index: {}]
  %s2 = inlined_call_operand.hbm [shape: f32[1,128], index: 2, kind: output, shape index: {}]
  %s3 = sld [smem:[#allocation0]]
  $region14: #{tpu_custom_call.1} parent=0
    _
  %s5 = ssub.s32 1, %s3
  %s6 = scalar_select 0, %s5, %s3
  %7 = sst [smem:[#allocation3]] %s0
  $region1: #{tpu_custom_call.1} parent=0
    #allocation4 [shape = 'u8[512]{0}', space=vmem, size = 0x400, scoped, tag = 'output window, operand 0, single buffered']
    #allocation5 [shape = 's32[1]{0}', space=sflag, size = 0x4, scoped, tag = 'scoped memory for tpu_custom_call.1']
    %8 = vsyncpa [#allocation5], 0
    // Predicated region
    $region2: #{tpu_custom_call.1} parent=1 // pred_check
      _
    $region3: #{tpu_custom_call.1} parent=1 // pred_check_branch
      %10 = sbr.rel (0) target = $region5
    $region4: #{tpu_custom_call.1} parent=1 // pred_region
      _
    $region5: #{tpu_custom_call.1} parent=1 // pred_fallthru
      _
    %v11 = vld [vmem:[%s1] sm:$0x1]
    %vm12 = vcmp.ge.f32.partialorder %v11, 0.0
    %v13 = vsel %vm12, 1, 0
    %v14 = vcvt.s32.f32 %v13
    %15 = vst [vmem:[#allocation4] sm:$0x1] %v14
    // Predicated region
    $region6: #{tpu_custom_call.1} parent=1 // pred_check
      _
    $region7: #{tpu_custom_call.1} parent=1 // pred_check_branch
      %17 = sbr.rel (0) target = $region9
    $region8: #{tpu_custom_call.1} parent=1 // pred_region
      %s19 = ssub.s32 16, 16
      %20 = vsyncadd [#allocation5], %s19
      %s22 = sshll.u32 [#allocation4], 4
      %s23 = int_to_ptr.vmem [resolvable:$true] %s22
      %25 = dma.vmem_to_hbm [thread:$0]  %s23, 16, %s2, [#allocation5]
    $region9: #{tpu_custom_call.1} parent=1 // pred_fallthru
      _
    // Predicated region
    $region10: #{tpu_custom_call.1} parent=1 // pred_check
      _
    $region11: #{tpu_custom_call.1} parent=1 // pred_check_branch
      %27 = sbr.rel (0) target = $region13
    $region12: #{tpu_custom_call.1} parent=1 // pred_region
      %28 = dma.done [#allocation5], 16
    $region13: #{tpu_custom_call.1} parent=1 // pred_fallthru
      _
    %29 = vsyncpa [#allocation5], 1

</llo_original>
